<compile_context>
chip_gen: v6e
topology: v6e:2x2x1
jax: 0.10.0
libtpu: 0.0.40
codegen_flags: <defaults>
</compile_context>

<pallas_src>
import functools
import math

import jax
import jax.numpy as jnp
from jax import lax
from jax.experimental import pallas as pl
from jax.experimental.pallas import tpu as pltpu

EPS = 1e-5


# --------------------------------------------------------------------------
# In-kernel math helpers (operate on values already loaded from refs)
# --------------------------------------------------------------------------
def _layernorm(x, g, b):
    # x: (S, C), g/b: (1, C); statistics in f32
    mu = jnp.mean(x, axis=-1, keepdims=True)
    var = jnp.mean(jnp.square(x - mu), axis=-1, keepdims=True)
    return (x - mu) * lax.rsqrt(var + EPS) * g + b


def _attn(q, k, v, wo, bo, nhead):
    # q: (S, d), k/v: (T, d); wo: (d, d) in (in, out) layout; bo: (1, d).
    # Per-head attention; the output projection is accumulated inside the head
    # loop (no lane-narrow concatenate).
    S, d = q.shape
    hd = d // nhead
    scale = 1.0 / math.sqrt(hd)
    out = jnp.zeros((S, d), jnp.float32)
    for h in range(nhead):                      # static unroll over heads
        lo = h * hd
        qh = q[:, lo:lo + hd] * scale
        kh = k[:, lo:lo + hd]
        vh = v[:, lo:lo + hd]
        s = lax.dot_general(qh, kh, (((1,), (1,)), ((), ())),
                            preferred_element_type=jnp.float32)        # (S, T)
        s = s - jnp.max(s, axis=-1, keepdims=True)
        p = jnp.exp(s)
        p = p * pl.reciprocal(jnp.sum(p, axis=-1, keepdims=True), approx=True)
        oh = jnp.dot(p, vh, preferred_element_type=jnp.float32)        # (S, hd)
        out = out + jnp.dot(oh, wo[lo:lo + hd, :],
                            preferred_element_type=jnp.float32)        # (S, d)
    return out + bo


# --------------------------------------------------------------------------
# Pallas kernels
# --------------------------------------------------------------------------
def ln_linear_kernel(x_ref, g_ref, b_ref, w_ref, bias_ref, o_ref):
    # LayerNorm -> Linear on a (tile_rows, C) slab.  w is (Cin, Cout).
    y = _layernorm(x_ref[...], g_ref[...], b_ref[...])
    y = jnp.dot(y, w_ref[...], preferred_element_type=jnp.float32) + bias_ref[...]
    o_ref[...] = y.astype(o_ref.dtype)


def ln_linear_ln_kernel(x_ref, g1_ref, b1_ref, w_ref, bias_ref, g2_ref, b2_ref,
                        o_ref):
    # LayerNorm -> Linear -> LayerNorm on a (tile_rows, C) slab.
    y = _layernorm(x_ref[...], g1_ref[...], b1_ref[...])
    y = jnp.dot(y, w_ref[...], preferred_element_type=jnp.float32) + bias_ref[...]
    o_ref[...] = _layernorm(y, g2_ref[...], b2_ref[...]).astype(o_ref.dtype)


def decoder_stack_kernel(x_ref, mem_ref,
                         ln1g, ln1b, sa_wqkv, sa_bqkv, sa_wo, sa_bo,
                         ln2g, ln2b, ca_wq, ca_bq, ca_wkv, ca_bkv, ca_wo, ca_bo,
                         ln3g, ln3b, w1, b1, w2, b2,
                         o_ref, x_acc, *, nhead):
    # One (batch element, layer) step of the fused decoder stack.
    # grid=(B, L); L is the inner ("arbitrary") axis, x_acc is resident across it.
    l = pl.program_id(1)

    @pl.when(l == 0)
    def _():
        x_acc[...] = x_ref[0].astype(jnp.float32)

    x = x_acc[...]                       # (K, d)
    mem = mem_ref[0]                     # (N, d)
    d = x.shape[-1]

    # self-attention:  q = k = v = LN1(x);  x = x + SA(q, k, v)   (fused QKV proj)
    h = _layernorm(x, ln1g[0], ln1b[0])
    qkv = jnp.dot(h, sa_wqkv[0], preferred_element_type=jnp.float32) + sa_bqkv[0]
    x = x + _attn(qkv[:, :d], qkv[:, d:2 * d], qkv[:, 2 * d:],
                  sa_wo[0], sa_bo[0], nhead)

    # cross-attention: q = LN2(x);  x = x + CA(q, mem, mem)   (fused KV proj)
    q = jnp.dot(_layernorm(x, ln2g[0], ln2b[0]), ca_wq[0],
                preferred_element_type=jnp.float32) + ca_bq[0]
    kv = jnp.dot(mem, ca_wkv[0], preferred_element_type=jnp.float32) + ca_bkv[0]
    x = x + _attn(q, kv[:, :d], kv[:, d:], ca_wo[0], ca_bo[0], nhead)

    # MLP: x = x + Linear2(GELU(Linear1(LN3(x))))    (dropout = identity, eval)
    h = _layernorm(x, ln3g[0], ln3b[0])
    h = jnp.dot(h, w1[0], preferred_element_type=jnp.float32) + b1[0]
    h = jax.nn.gelu(h, approximate=False)            # exact erf GELU = nn.GELU()
    h = jnp.dot(h, w2[0], preferred_element_type=jnp.float32) + b2[0]
    x = x + h

    x_acc[...] = x

    @pl.when(l == pl.num_programs(1) - 1)
    def _():
        o_ref[0] = x.astype(o_ref.dtype)


# --------------------------------------------------------------------------
# pallas_call wrappers
# --------------------------------------------------------------------------
def _row_tile(rows):
    # Largest "nice" row tile that divides rows; otherwise the full row count
    # (block dims must be divisible by (8,128) OR equal the full dim).
    for t in (512, 256, 128):
        if rows % t == 0:
            return t
    return rows


def _const_spec(arr):
    nd = arr.ndim
    return pl.BlockSpec(arr.shape, lambda i, _nd=nd: (0,) * _nd)


def ln_linear(x, g, b, w_t, bias):
    # x: (B, S, Cin) -> (B, S, Cout); rows flattened so the matmul M dim is big.
    B, S, Cin = x.shape
    Cout = w_t.shape[1]
    rows = B * S
    tile = _row_tile(rows)
    out = pl.pallas_call(
        ln_linear_kernel,
        out_shape=jax.ShapeDtypeStruct((rows, Cout), jnp.float32),
        grid=(rows // tile,),
        in_specs=[pl.BlockSpec((tile, Cin), lambda i: (i, 0)),
                  _const_spec(g), _const_spec(b), _const_spec(w_t),
                  _const_spec(bias)],
        out_specs=pl.BlockSpec((tile, Cout), lambda i: (i, 0)),
        compiler_params=pltpu.CompilerParams(dimension_semantics=("parallel",)),
    )(x.reshape(rows, Cin), g, b, w_t, bias)
    return out.reshape(B, S, Cout)


def ln_linear_ln(x, g1, b1, w_t, bias, g2, b2):
    B, S, Cin = x.shape
    Cout = w_t.shape[1]
    rows = B * S
    tile = _row_tile(rows)
    out = pl.pallas_call(
        ln_linear_ln_kernel,
        out_shape=jax.ShapeDtypeStruct((rows, Cout), jnp.float32),
        grid=(rows // tile,),
        in_specs=[pl.BlockSpec((tile, Cin), lambda i: (i, 0)),
                  _const_spec(g1), _const_spec(b1), _const_spec(w_t),
                  _const_spec(bias), _const_spec(g2), _const_spec(b2)],
        out_specs=pl.BlockSpec((tile, Cout), lambda i: (i, 0)),
        compiler_params=pltpu.CompilerParams(dimension_semantics=("parallel",)),
    )(x.reshape(rows, Cin), g1, b1, w_t, bias, g2, b2)
    return out.reshape(B, S, Cout)


_STACK_NAMES = ["ln1_g", "ln1_b", "sa_wqkv", "sa_bqkv", "sa_wo", "sa_bo",
                "ln2_g", "ln2_b", "ca_wq", "ca_bq", "ca_wkv", "ca_bkv",
                "ca_wo", "ca_bo", "ln3_g", "ln3_b", "w1", "b1", "w2", "b2"]


def decoder_stack(x, mem, stacked, nhead):
    # Single pallas_call for the whole decoder stack.  grid=(B, L); weights are
    # (L, ...) arrays streamed along the inner ("arbitrary") layer axis.
    B, K, d = x.shape
    N = mem.shape[1]
    L = stacked["ln1_g"].shape[0]
    weights = [stacked[n] for n in _STACK_NAMES]

    def wspec(arr):
        shp = (1,) + arr.shape[1:]
        nd = arr.ndim
        return pl.BlockSpec(shp, lambda b, l, _nd=nd: (l,) + (0,) * (_nd - 1))

    in_specs = ([pl.BlockSpec((1, K, d), lambda b, l: (b, 0, 0)),
                 pl.BlockSpec((1, N, d), lambda b, l: (b, 0, 0))]
                + [wspec(a) for a in weights])

    return pl.pallas_call(
        functools.partial(decoder_stack_kernel, nhead=nhead),
        out_shape=jax.ShapeDtypeStruct((B, K, d), jnp.float32),
        grid=(B, L),
        in_specs=in_specs,
        out_specs=pl.BlockSpec((1, K, d), lambda b, l: (b, 0, 0)),
        scratch_shapes=[pltpu.VMEM((K, d), jnp.float32)],
        compiler_params=pltpu.CompilerParams(
            dimension_semantics=("parallel", "arbitrary"),
            vmem_limit_bytes=48 * 1024 * 1024),
    )(x, mem, *weights)


def context_decoder_forward(text, visual, params, nhead):
    # memory_proj: LN(visual_dim) -> Linear(visual_dim, width) -> LN(width)
    mem = ln_linear_ln(visual,
                       params["mem_ln1_g"], params["mem_ln1_b"],
                       params["mem_w_t"], params["mem_b"],
                       params["mem_ln2_g"], params["mem_ln2_b"])
    # text_proj: LN(visual_dim) -> Linear(visual_dim, width)
    x = ln_linear(text,
                  params["txt_ln_g"], params["txt_ln_b"],
                  params["txt_w_t"], params["txt_b"])
    # fused decoder stack
    x = decoder_stack(x, mem, params["layers_stacked"], nhead)
    # out_proj: LN(width) -> Linear(width, visual_dim)
    return ln_linear(x,
                     params["out_ln_g"], params["out_ln_b"],
                     params["out_w_t"], params["out_b"])


# --------------------------------------------------------------------------
# Parameter init (PyTorch layout) + one-time host-side layout preparation
# --------------------------------------------------------------------------
def init_params(key, visual_dim, width, n_layers):
    keys = list(jax.random.split(key, 8 + 24 * n_layers))
    it = iter(keys)

    def lin_w(cout, cin):
        # trunc_normal_(std=0.02) analogue; PyTorch (out, in) layout
        return 0.02 * jax.random.truncated_normal(
            next(it), -2.0, 2.0, (cout, cin), jnp.float32)

    def zeros(c):
        return jnp.zeros((1, c), jnp.float32)

    def ones(c):
        return jnp.ones((1, c), jnp.float32)

    def rand_b(c):
        # small nonzero biases so the bias-add path is exercised
        return 0.02 * jax.random.normal(next(it), (1, c), jnp.float32)

    params = {
        "mem_ln1_g": ones(visual_dim), "mem_ln1_b": zeros(visual_dim),
        "mem_w": lin_w(width, visual_dim), "mem_b": rand_b(width),
        "mem_ln2_g": ones(width), "mem_ln2_b": zeros(width),
        "txt_ln_g": ones(visual_dim), "txt_ln_b": zeros(visual_dim),
        "txt_w": lin_w(width, visual_dim), "txt_b": rand_b(width),
        "out_ln_g": ones(width), "out_ln_b": zeros(width),
        "out_w": lin_w(visual_dim, width), "out_b": rand_b(visual_dim),
        "layers": [],
    }
    for _ in range(n_layers):
        lp = {
            "ln1_g": ones(width), "ln1_b": zeros(width),
            "sa_wq": lin_w(width, width), "sa_wk": lin_w(width, width),
            "sa_wv": lin_w(width, width),
            "sa_bq": rand_b(width), "sa_bk": rand_b(width), "sa_bv": rand_b(width),
            "sa_wo": lin_w(width, width), "sa_bo": rand_b(width),
            "ln2_g": ones(width), "ln2_b": zeros(width),
            "ca_wq": lin_w(width, width), "ca_wk": lin_w(width, width),
            "ca_wv": lin_w(width, width),
            "ca_bq": rand_b(width), "ca_bk": rand_b(width), "ca_bv": rand_b(width),
            "ca_wo": lin_w(width, width), "ca_bo": rand_b(width),
            "ln3_g": ones(width), "ln3_b": zeros(width),
            "w1": lin_w(4 * width, width), "b1": rand_b(4 * width),
            "w2": lin_w(width, 4 * width), "b2": rand_b(width),
        }
        params["layers"].append(lp)
    return params


def prepare_params(p):
    # One-time host-side prep: transpose every weight to (Cin, Cout), fuse the
    # QKV / KV projections, stack per-layer tensors along a leading L axis.
    prepared = {
        "mem_ln1_g": p["mem_ln1_g"], "mem_ln1_b": p["mem_ln1_b"],
        "mem_w_t": p["mem_w"].T, "mem_b": p["mem_b"],
        "mem_ln2_g": p["mem_ln2_g"], "mem_ln2_b": p["mem_ln2_b"],
        "txt_ln_g": p["txt_ln_g"], "txt_ln_b": p["txt_ln_b"],
        "txt_w_t": p["txt_w"].T, "txt_b": p["txt_b"],
        "out_ln_g": p["out_ln_g"], "out_ln_b": p["out_ln_b"],
        "out_w_t": p["out_w"].T, "out_b": p["out_b"],
    }

    def stack(fn):
        return jnp.stack([fn(lp) for lp in p["layers"]], axis=0)

    prepared["layers_stacked"] = {
        "ln1_g": stack(lambda lp: lp["ln1_g"]),
        "ln1_b": stack(lambda lp: lp["ln1_b"]),
        "sa_wqkv": stack(lambda lp: jnp.concatenate(
            [lp["sa_wq"], lp["sa_wk"], lp["sa_wv"]], axis=0).T),
        "sa_bqkv": stack(lambda lp: jnp.concatenate(
            [lp["sa_bq"], lp["sa_bk"], lp["sa_bv"]], axis=-1)),
        "sa_wo": stack(lambda lp: lp["sa_wo"].T),
        "sa_bo": stack(lambda lp: lp["sa_bo"]),
        "ln2_g": stack(lambda lp: lp["ln2_g"]),
        "ln2_b": stack(lambda lp: lp["ln2_b"]),
        "ca_wq": stack(lambda lp: lp["ca_wq"].T),
        "ca_bq": stack(lambda lp: lp["ca_bq"]),
        "ca_wkv": stack(lambda lp: jnp.concatenate(
            [lp["ca_wk"], lp["ca_wv"]], axis=0).T),
        "ca_bkv": stack(lambda lp: jnp.concatenate(
            [lp["ca_bk"], lp["ca_bv"]], axis=-1)),
        "ca_wo": stack(lambda lp: lp["ca_wo"].T),
        "ca_bo": stack(lambda lp: lp["ca_bo"]),
        "ln3_g": stack(lambda lp: lp["ln3_g"]),
        "ln3_b": stack(lambda lp: lp["ln3_b"]),
        "w1": stack(lambda lp: lp["w1"].T),
        "b1": stack(lambda lp: lp["b1"]),
        "w2": stack(lambda lp: lp["w2"].T),
        "b2": stack(lambda lp: lp["b2"]),
    }
    return prepared


# --------------------------------------------------------------------------
if __name__ == "__main__":
    # Small shapes consistent with ContextDecoder.forward(text, visual):
    #   text:   (B, K, visual_dim)
    #   visual: (B, N, visual_dim)
    B, K, N = 2, 8, 16
    visual_dim, width, nhead, n_layers = 64, 32, 4, 2

    key = jax.random.PRNGKey(0)
    k_text, k_vis, k_par = jax.random.split(key, 3)
    text = jax.random.normal(k_text, (B, K, visual_dim), jnp.float32)
    visual = jax.random.normal(k_vis, (B, N, visual_dim), jnp.float32)
    params = prepare_params(init_params(k_par, visual_dim, width, n_layers))

    # TODO(synk): dropout (p=0.1) is modelled as identity (eval-mode semantics);
    # at toy widths (32/64 < 128 lanes) output stores are necessarily lane-masked.
    out = context_decoder_forward(text, visual, params, nhead)
    out = jax.block_until_ready(out)
    assert out.shape == (B, K, visual_dim), out.shape
    assert bool(jnp.all(jnp.isfinite(out)))
    print("KERNEL_OK")
</pallas_src>

<mosaic_0001>
module attributes {stable_mosaic.version = 11 : i64} {
  func.func @ln_linear_ln_kernel(%arg0: i32, %arg1: memref<32x64xf32, #tpu.memory_space<vmem>>, %arg2: memref<1x64xf32, #tpu.memory_space<vmem>>, %arg3: memref<1x64xf32, #tpu.memory_space<vmem>>, %arg4: memref<64x32xf32, #tpu.memory_space<vmem>>, %arg5: memref<1x32xf32, #tpu.memory_space<vmem>>, %arg6: memref<1x32xf32, #tpu.memory_space<vmem>>, %arg7: memref<1x32xf32, #tpu.memory_space<vmem>>, %arg8: memref<32x32xf32, #tpu.memory_space<vmem>>) attributes {dimension_semantics = [#tpu.dimension_semantics<parallel>], iteration_bounds = array<i64: 1>, scalar_prefetch = 0 : i64, scratch_operands = 0 : i64, tpu.core_type = #tpu.core_type<tc>, window_params = [{transform_indices = @transform_0, window_bounds = array<i64: 32, 64>}, {pipeline_mode = #tpu.pipeline_mode<synchronous>, transform_indices = @transform_1, window_bounds = array<i64: 1, 64>}, {pipeline_mode = #tpu.pipeline_mode<synchronous>, transform_indices = @transform_2, window_bounds = array<i64: 1, 64>}, {pipeline_mode = #tpu.pipeline_mode<synchronous>, transform_indices = @transform_3, window_bounds = array<i64: 64, 32>}, {pipeline_mode = #tpu.pipeline_mode<synchronous>, transform_indices = @transform_4, window_bounds = array<i64: 1, 32>}, {pipeline_mode = #tpu.pipeline_mode<synchronous>, transform_indices = @transform_5, window_bounds = array<i64: 1, 32>}, {pipeline_mode = #tpu.pipeline_mode<synchronous>, transform_indices = @transform_6, window_bounds = array<i64: 1, 32>}, {transform_indices = @transform_7, window_bounds = array<i64: 32, 32>}]} {
    %c0 = arith.constant 0 : index
    %c0_0 = arith.constant 0 : index
    %0 = vector.load %arg1[%c0, %c0_0] : memref<32x64xf32, #tpu.memory_space<vmem>>, vector<32x64xf32>
    %c0_1 = arith.constant 0 : index
    %c0_2 = arith.constant 0 : index
    %1 = vector.load %arg2[%c0_1, %c0_2] : memref<1x64xf32, #tpu.memory_space<vmem>>, vector<1x64xf32>
    %c0_3 = arith.constant 0 : index
    %c0_4 = arith.constant 0 : index
    %2 = vector.load %arg3[%c0_3, %c0_4] : memref<1x64xf32, #tpu.memory_space<vmem>>, vector<1x64xf32>
    %cst = arith.constant dense<0.000000e+00> : vector<32xf32>
    %3 = vector.multi_reduction <add>, %0, %cst [1] : vector<32x64xf32> to vector<32xf32>
    %4 = vector.shape_cast %3 : vector<32xf32> to vector<32x1xf32>
    %cst_5 = arith.constant 6.400000e+01 : f32
    %5 = vector.broadcast %cst_5 : f32 to vector<32x1xf32>
    %6 = arith.divf %4, %5 : vector<32x1xf32>
    %7 = vector.broadcast %6 : vector<32x1xf32> to vector<32x64xf32>
    %8 = arith.subf %0, %7 : vector<32x64xf32>
    %9 = arith.mulf %8, %8 : vector<32x64xf32>
    %cst_6 = arith.constant dense<0.000000e+00> : vector<32xf32>
    %10 = vector.multi_reduction <add>, %9, %cst_6 [1] : vector<32x64xf32> to vector<32xf32>
    %11 = vector.shape_cast %10 : vector<32xf32> to vector<32x1xf32>
    %cst_7 = arith.constant 6.400000e+01 : f32
    %12 = vector.broadcast %cst_7 : f32 to vector<32x1xf32>
    %13 = arith.divf %11, %12 : vector<32x1xf32>
    %14 = vector.broadcast %6 : vector<32x1xf32> to vector<32x64xf32>
    %15 = arith.subf %0, %14 : vector<32x64xf32>
    %cst_8 = arith.constant 9.99999974E-6 : f32
    %16 = vector.broadcast %cst_8 : f32 to vector<32x1xf32>
    %17 = arith.addf %13, %16 : vector<32x1xf32>
    %18 = math.rsqrt %17 : vector<32x1xf32>
    %19 = vector.broadcast %18 : vector<32x1xf32> to vector<32x64xf32>
    %20 = arith.mulf %15, %19 : vector<32x64xf32>
    %21 = vector.broadcast %1 : vector<1x64xf32> to vector<32x64xf32>
    %22 = arith.mulf %20, %21 : vector<32x64xf32>
    %23 = vector.broadcast %2 : vector<1x64xf32> to vector<32x64xf32>
    %24 = arith.addf %22, %23 : vector<32x64xf32>
    %c0_9 = arith.constant 0 : index
    %c0_10 = arith.constant 0 : index
    %25 = vector.load %arg4[%c0_9, %c0_10] : memref<64x32xf32, #tpu.memory_space<vmem>>, vector<64x32xf32>
    %cst_11 = arith.constant dense<0.000000e+00> : vector<32x32xf32>
    %26 = tpu.matmul %24, %25, %cst_11 {dimension_numbers = #tpu.dot_dimension_numbers<[1], [0], [0], [1], [0, 0, 1, 1], [], []>} : vector<32x64xf32>, vector<64x32xf32>, vector<32x32xf32> -> vector<32x32xf32>
    %c0_12 = arith.constant 0 : index
    %c0_13 = arith.constant 0 : index
    %27 = vector.load %arg5[%c0_12, %c0_13] : memref<1x32xf32, #tpu.memory_space<vmem>>, vector<1x32xf32>
    %28 = vector.broadcast %27 : vector<1x32xf32> to vector<32x32xf32>
    %29 = arith.addf %26, %28 : vector<32x32xf32>
    %c0_14 = arith.constant 0 : index
    %c0_15 = arith.constant 0 : index
    %30 = vector.load %arg6[%c0_14, %c0_15] : memref<1x32xf32, #tpu.memory_space<vmem>>, vector<1x32xf32>
    %c0_16 = arith.constant 0 : index
    %c0_17 = arith.constant 0 : index
    %31 = vector.load %arg7[%c0_16, %c0_17] : memref<1x32xf32, #tpu.memory_space<vmem>>, vector<1x32xf32>
    %cst_18 = arith.constant dense<0.000000e+00> : vector<32xf32>
    %32 = vector.multi_reduction <add>, %29, %cst_18 [1] : vector<32x32xf32> to vector<32xf32>
    %33 = vector.shape_cast %32 : vector<32xf32> to vector<32x1xf32>
    %cst_19 = arith.constant 3.200000e+01 : f32
    %34 = vector.broadcast %cst_19 : f32 to vector<32x1xf32>
    %35 = arith.divf %33, %34 : vector<32x1xf32>
    %36 = vector.broadcast %35 : vector<32x1xf32> to vector<32x32xf32>
    %37 = arith.subf %29, %36 : vector<32x32xf32>
    %38 = arith.mulf %37, %37 : vector<32x32xf32>
    %cst_20 = arith.constant dense<0.000000e+00> : vector<32xf32>
    %39 = vector.multi_reduction <add>, %38, %cst_20 [1] : vector<32x32xf32> to vector<32xf32>
    %40 = vector.shape_cast %39 : vector<32xf32> to vector<32x1xf32>
    %cst_21 = arith.constant 3.200000e+01 : f32
    %41 = vector.broadcast %cst_21 : f32 to vector<32x1xf32>
    %42 = arith.divf %40, %41 : vector<32x1xf32>
    %43 = vector.broadcast %35 : vector<32x1xf32> to vector<32x32xf32>
    %44 = arith.subf %29, %43 : vector<32x32xf32>
    %cst_22 = arith.constant 9.99999974E-6 : f32
    %45 = vector.broadcast %cst_22 : f32 to vector<32x1xf32>
    %46 = arith.addf %42, %45 : vector<32x1xf32>
    %47 = math.rsqrt %46 : vector<32x1xf32>
    %48 = vector.broadcast %47 : vector<32x1xf32> to vector<32x32xf32>
    %49 = arith.mulf %44, %48 : vector<32x32xf32>
    %50 = vector.broadcast %30 : vector<1x32xf32> to vector<32x32xf32>
    %51 = arith.mulf %49, %50 : vector<32x32xf32>
    %52 = vector.broadcast %31 : vector<1x32xf32> to vector<32x32xf32>
    %53 = arith.addf %51, %52 : vector<32x32xf32>
    %c0_23 = arith.constant 0 : index
    %c0_24 = arith.constant 0 : index
    %54 = vector.load %arg8[%c0_23, %c0_24] : memref<32x32xf32, #tpu.memory_space<vmem>>, vector<32x32xf32>
    tpu.vector_store %arg8[%c0_23, %c0_24], %53 {strides = array<i32>} : memref<32x32xf32, #tpu.memory_space<vmem>>, vector<32x32xf32>,
    return
  }
  func.func @transform_0(%arg0: i32) -> (i32, i32) {
    %c0_i32 = arith.constant 0 : i32
    %c0_i32_0 = arith.constant 0 : i32
    return %arg0, %c0_i32 : i32, i32
  }
  func.func @transform_1(%arg0: i32) -> (i32, i32) {
    %c0_i32 = arith.constant 0 : i32
    %c0_i32_0 = arith.constant 0 : i32
    %c0_i32_1 = arith.constant 0 : i32
    return %c0_i32, %c0_i32_0 : i32, i32
  }
  func.func @transform_2(%arg0: i32) -> (i32, i32) {
    %c0_i32 = arith.constant 0 : i32
    %c0_i32_0 = arith.constant 0 : i32
    %c0_i32_1 = arith.constant 0 : i32
    return %c0_i32, %c0_i32_0 : i32, i32
  }
  func.func @transform_3(%arg0: i32) -> (i32, i32) {
    %c0_i32 = arith.constant 0 : i32
    %c0_i32_0 = arith.constant 0 : i32
    %c0_i32_1 = arith.constant 0 : i32
    return %c0_i32, %c0_i32_0 : i32, i32
  }
  func.func @transform_4(%arg0: i32) -> (i32, i32) {
    %c0_i32 = arith.constant 0 : i32
    %c0_i32_0 = arith.constant 0 : i32
    %c0_i32_1 = arith.constant 0 : i32
    return %c0_i32, %c0_i32_0 : i32, i32
  }
  func.func @transform_5(%arg0: i32) -> (i32, i32) {
    %c0_i32 = arith.constant 0 : i32
    %c0_i32_0 = arith.constant 0 : i32
    %c0_i32_1 = arith.constant 0 : i32
    return %c0_i32, %c0_i32_0 : i32, i32
  }
  func.func @transform_6(%arg0: i32) -> (i32, i32) {
    %c0_i32 = arith.constant 0 : i32
    %c0_i32_0 = arith.constant 0 : i32
    %c0_i32_1 = arith.constant 0 : i32
    return %c0_i32, %c0_i32_0 : i32, i32
  }
  func.func @transform_7(%arg0: i32) -> (i32, i32) {
    %c0_i32 = arith.constant 0 : i32
    %c0_i32_0 = arith.constant 0 : i32
    return %arg0, %c0_i32 : i32, i32
  }
}

</mosaic_0001>

<llo_original>
// kernel: tpu_custom_call.1
$region0: #{tpu_custom_call.1}
  #allocation0 [shape = 'u32[]', space=smem, size = 0x4, offset = 0x4, fixed_abs, tag = 'smem constant byte address 0x4 - core index']
  #allocation1 [shape = 'u32[144,128]{1,0:T(1,128)}', space=vmem, size = 0x12000, scoped, tag = 'internal scratch']
  %s0 = inlined_call_operand.vmem [shape: f32[32,64], index: 0, kind: input, shape index: {}]
  %s1 = inlined_call_operand.vmem [shape: f32[1,64], index: 1, kind: input, shape index: {}]
  %s2 = inlined_call_operand.vmem [shape: f32[1,64], index: 2, kind: input, shape index: {}]
  %s3 = inlined_call_operand.vmem [shape: f32[64,32], index: 3, kind: input, shape index: {}]
  %s4 = inlined_call_operand.vmem [shape: f32[1,32], index: 4, kind: input, shape index: {}]
  %s5 = inlined_call_operand.vmem [shape: f32[1,32], index: 5, kind: input, shape index: {}]
  %s6 = inlined_call_operand.vmem [shape: f32[1,32], index: 6, kind: input, shape index: {}]
  %s7 = inlined_call_operand.hbm [shape: f32[32,32], index: 7, kind: output, shape index: {}]
  %s8 = sld [smem:[#allocation0]]
  $region38: #{tpu_custom_call.1} parent=0
    _
  %s10 = ssub.s32 1, %s8
  %s11 = scalar_select 0, %s10, %s8
  $region1: #{tpu_custom_call.1} parent=0
    #allocation2 [shape = 'u8[16384]{0}', space=vmem, size = 0x4000, scoped, tag = 'output window, operand 0, single buffered']
    #allocation3 [shape = 's32[1]{0}', space=sflag, size = 0x4, scoped, tag = 'scoped memory for tpu_custom_call.1']
    %12 = vsyncpa [#allocation3], 0
    // Predicated region
    $region2: #{tpu_custom_call.1} parent=1 // pred_check
      _
    $region3: #{tpu_custom_call.1} parent=1 // pred_check_branch
      %14 = sbr.rel (0) target = $region5
    $region4: #{tpu_custom_call.1} parent=1 // pred_region
      _
    $region5: #{tpu_custom_call.1} parent=1 // pred_fallthru
      _
    // Predicated region
    $region6: #{tpu_custom_call.1} parent=1 // pred_check
      _
    $region7: #{tpu_custom_call.1} parent=1 // pred_check_branch
      %16 = sbr.rel (0) target = $region9
    $region8: #{tpu_custom_call.1} parent=1 // pred_region
      _
    $region9: #{tpu_custom_call.1} parent=1 // pred_fallthru
      _
    // Predicated region
    $region10: #{tpu_custom_call.1} parent=1 // pred_check
      _
    $region11: #{tpu_custom_call.1} parent=1 // pred_check_branch
      %18 = sbr.rel (0) target = $region13
    $region12: #{tpu_custom_call.1} parent=1 // pred_region
      _
    $region13: #{tpu_custom_call.1} parent=1 // pred_fallthru
      _
    // Predicated region
    $region14: #{tpu_custom_call.1} parent=1 // pred_check
      _
    $region15: #{tpu_custom_call.1} parent=1 // pred_check_branch
      %20 = sbr.rel (0) target = $region17
    $region16: #{tpu_custom_call.1} parent=1 // pred_region
      _
    $region17: #{tpu_custom_call.1} parent=1 // pred_fallthru
      _
    // Predicated region
    $region18: #{tpu_custom_call.1} parent=1 // pred_check
      _
    $region19: #{tpu_custom_call.1} parent=1 // pred_check_branch
      %22 = sbr.rel (0) target = $region21
    $region20: #{tpu_custom_call.1} parent=1 // pred_region
      _
    $region21: #{tpu_custom_call.1} parent=1 // pred_fallthru
      _
    // Predicated region
    $region22: #{tpu_custom_call.1} parent=1 // pred_check
      _
    $region23: #{tpu_custom_call.1} parent=1 // pred_check_branch
      %24 = sbr.rel (0) target = $region25
    $region24: #{tpu_custom_call.1} parent=1 // pred_region
      _
    $region25: #{tpu_custom_call.1} parent=1 // pred_fallthru
      _
    // Predicated region
    $region26: #{tpu_custom_call.1} parent=1 // pred_check
      _
    $region27: #{tpu_custom_call.1} parent=1 // pred_check_branch
      %26 = sbr.rel (0) target = $region29
    $region28: #{tpu_custom_call.1} parent=1 // pred_region
      _
    $region29: #{tpu_custom_call.1} parent=1 // pred_fallthru
      _
    %v27 = vld [vmem:[%s0] sm:$0xff]
    %v28 = vld [vmem:[%s0 + $0x8] sm:$0xff]
    %v29 = vld [vmem:[%s0 + $0x10] sm:$0xff]
    %v30 = vld [vmem:[%s0 + $0x18] sm:$0xff]
    %v31 = vld [vmem:[%s1] sm:$0x1]
    %v32 = vld [vmem:[%s2] sm:$0x1]
    %vm33 = vcmask 523264
    %v34 = vsel %vm33, %v27, 0.0
    %35 = vadd.xlane.f32.xlu0 %v34
    %v36 = vpop.xlane.xlu0 %35
    %v37 = vsel %vm33, %v28, 0.0
    %38 = vadd.xlane.f32.xlu0 %v37
    %v39 = vpop.xlane.xlu0 %38
    %v40 = vsel %vm33, %v29, 0.0
    %41 = vadd.xlane.f32.xlu0 %v40
    %v42 = vpop.xlane.xlu0 %41
    %v43 = vsel %vm33, %v30, 0.0
    %44 = vadd.xlane.f32.xlu0 %v43
    %v45 = vpop.xlane.xlu0 %44
    %v46 = vrcp.pop 64.0
    %v47 = vmul.f32 %v36, %v46
    %v48 = vmul.f32 %v39, %v46
    %v49 = vmul.f32 %v42, %v46
    %v50 = vmul.f32 %v45, %v46
    %v51 = vsub.f32 %v27, %v47
    %v52 = vsub.f32 %v28, %v48
    %v53 = vsub.f32 %v29, %v49
    %v54 = vsub.f32 %v30, %v50
    %v55 = vmul.f32 %v51, %v51
    %v56 = vmul.f32 %v52, %v52
    %v57 = vmul.f32 %v53, %v53
    %v58 = vmul.f32 %v54, %v54
    %v59 = vsel %vm33, %v55, 0.0
    %60 = vadd.xlane.f32.xlu0 %v59
    %v61 = vpop.xlane.xlu0 %60
    %v62 = vsel %vm33, %v56, 0.0
    %63 = vadd.xlane.f32.xlu0 %v62
    %v64 = vpop.xlane.xlu0 %63
    %v65 = vsel %vm33, %v57, 0.0
    %66 = vadd.xlane.f32.xlu0 %v65
    %v67 = vpop.xlane.xlu0 %66
    %v68 = vsel %vm33, %v58, 0.0
    %69 = vadd.xlane.f32.xlu0 %v68
    %v70 = vpop.xlane.xlu0 %69
    %v71 = vmul.f32 %v61, %v46
    %v72 = vmul.f32 %v64, %v46
    %v73 = vmul.f32 %v67, %v46
    %v74 = vmul.f32 %v70, %v46
    %v75 = vadd.f32 %v71, 1e-05
    %v76 = vadd.f32 %v72, 1e-05
    %v77 = vadd.f32 %v73, 1e-05
    %v78 = vadd.f32 %v74, 1e-05
    %v79 = vrsqrt.pop %v75
    %v80 = vrsqrt.pop %v76
    %v81 = vrsqrt.pop %v77
    %v82 = vrsqrt.pop %v78
    %v83 = vmul.f32 %v51, %v79
    %v84 = vmul.f32 %v52, %v80
    %v85 = vmul.f32 %v53, %v81
    %v86 = vmul.f32 %v54, %v82
    %v88 = vlaneseq
    %v89 = vshrl.u32 %v88, 7
    %v90 = vsub.s32 0, %v89
    %v91 = vrot.slane %v31, %v90
    %v93 = vmul.f32 %v83, %v91
    %v94 = vmul.f32 %v84, %v91
    %v95 = vmul.f32 %v85, %v91
    %v96 = vmul.f32 %v86, %v91
    %v98 = vlaneseq
    %v99 = vshrl.u32 %v98, 7
    %v100 = vsub.s32 0, %v99
    %v101 = vrot.slane %v32, %v100
    %v103 = vadd.f32 %v93, %v101
    %v104 = vadd.f32 %v94, %v101
    %v105 = vadd.f32 %v95, %v101
    %v106 = vadd.f32 %v96, %v101
    %v107 = vld [vmem:[%s3] sm:$0xff]
    %v108 = vld [vmem:[%s3 + $0x8] sm:$0xff]
    %v109 = vld [vmem:[%s3 + $0x10] sm:$0xff]
    %v110 = vld [vmem:[%s3 + $0x18] sm:$0xff]
    %v111 = vld [vmem:[%s3 + $0x20] sm:$0xff]
    %v112 = vld [vmem:[%s3 + $0x28] sm:$0xff]
    %v113 = vld [vmem:[%s3 + $0x30] sm:$0xff]
    %v114 = vld [vmem:[%s3 + $0x38] sm:$0xff]
    %v115 = vld [vmem:[%s4] sm:$0x1]
    %v117 = vlaneseq
    %v118 = vshrl.u32 %v117, 7
    %v119 = vsub.s32 0, %v118
    %v120 = vrot.slane %v115, %v119
    %v123 = vsel %vm33, %v103, 0
    %v126 = vsel %vm33, %v104, 0
    %v129 = vsel %vm33, %v105, 0
    %v132 = vsel %vm33, %v106, 0
    %134 = vmatprep.subr.mxu0 0.0
    %135 = vmatpush1.msra.mxu0 0.0
    %136 = vmatprep.subr.mxu0 0.0
    %137 = vmatpush1.msra.mxu0 0.0
    %138 = vmatprep.subr.mxu0 0.0
    %139 = vmatpush1.msra.mxu0 0.0
    %140 = vmatprep.subr.mxu0 0.0
    %141 = vmatpush1.msra.mxu0 0.0
    %142 = vmatprep.subr.mxu0 0.0
    %143 = vmatpush1.msra.mxu0 0.0
    %144 = vmatprep.subr.mxu0 0.0
    %145 = vmatpush1.msra.mxu0 0.0
    %146 = vmatprep.subr.mxu0 0.0
    %147 = vmatpush1.msra.mxu0 0.0
    %148 = vmatprep.subr.mxu0 0.0
    %149 = vmatpush1.msra.mxu0 0.0
    %150 = vmatprep.subr.mxu0 0.0
    %151 = vmatpush1.msra.mxu0 %v114
    %152 = vmatprep.subr.mxu0 0.0
    %153 = vmatpush1.msra.mxu0 %v113
    %154 = vmatprep.subr.mxu0 0.0
    %155 = vmatpush1.msra.mxu0 %v112
    %156 = vmatprep.subr.mxu0 0.0
    %157 = vmatpush1.msra.mxu0 %v111
    %158 = vmatprep.subr.mxu0 0.0
    %159 = vmatpush1.msra.mxu0 %v110
    %160 = vmatprep.subr.mxu0 0.0
    %161 = vmatpush1.msra.mxu0 %v109
    %162 = vmatprep.subr.mxu0 0.0
    %163 = vmatpush1.msra.mxu0 %v108
    %164 = vmatprep.subr.mxu0 0.0
    %165 = vmatpush1.msra.mxu0 %v107
    %166 = vmatprep.subr.mxu0 0.0
    %167 = vmatpush2.msra.mxu0 0.0
    %168 = vmatprep.subr.mxu0 0.0
    %169 = vmatpush2.msra.mxu0 0.0
    %170 = vmatprep.subr.mxu0 0.0
    %171 = vmatpush2.msra.mxu0 0.0
    %172 = vmatprep.subr.mxu0 0.0
    %173 = vmatpush2.msra.mxu0 0.0
    %174 = vmatprep.subr.mxu0 0.0
    %175 = vmatpush2.msra.mxu0 0.0
    %176 = vmatprep.subr.mxu0 0.0
    %177 = vmatpush2.msra.mxu0 0.0
    %178 = vmatprep.subr.mxu0 0.0
    %179 = vmatpush2.msra.mxu0 0.0
    %180 = vmatprep.subr.mxu0 0.0
    %181 = vmatpush2.msra.mxu0 0.0
    %182 = vmatprep.subr.mxu0 0.0
    %183 = vmatpush2.msra.mxu0 0.0
    %184 = vmatprep.subr.mxu0 0.0
    %185 = vmatpush2.msra.mxu0 0.0
    %186 = vmatprep.subr.mxu0 0.0
    %187 = vmatpush2.msra.mxu0 0.0
    %188 = vmatprep.subr.mxu0 0.0
    %189 = vmatpush2.msra.mxu0 0.0
    %190 = vmatprep.subr.mxu0 0.0
    %191 = vmatpush2.msra.mxu0 0.0
    %192 = vmatprep.subr.mxu0 0.0
    %193 = vmatpush2.msra.mxu0 0.0
    %194 = vmatprep.subr.mxu0 0.0
    %195 = vmatpush2.msra.mxu0 0.0
    %196 = vmatprep.subr.mxu0 0.0
    %197 = vmatpush2.msra.mxu0 0.0
    %198 = vmatprep.mubr.f32.mxu0 0.0
    %199 = vmatmul.mubr.f32.gmra.mxu0 %v123
    %v200 = vpop.f32.mrf.mxu0
    %v201 = vadd.f32 %v120, %v200
    %v202 = vpop.f32.mrf.mxu0
    %203 = vmatprep.mubr.f32.mxu0 0.0
    %204 = vmatmul.mubr.f32.gmra.mxu0 %v126
    %v205 = vpop.f32.mrf.mxu0
    %v206 = vadd.f32 %v120, %v205
    %v207 = vpop.f32.mrf.mxu0
    %208 = vmatprep.mubr.f32.mxu0 0.0
    %209 = vmatmul.mubr.f32.gmra.mxu0 %v129
    %v210 = vpop.f32.mrf.mxu0
    %v211 = vadd.f32 %v120, %v210
    %v212 = vpop.f32.mrf.mxu0
    %213 = vmatprep.mubr.f32.mxu0 0.0
    %214 = vmatmul.mubr.f32.gmra.mxu0 %v132
    %v215 = vpop.f32.mrf.mxu0
    %v216 = vadd.f32 %v120, %v215
    %v217 = vpop.f32.mrf.mxu0
    %218 = vdwg.mxu0
    %v219 = vld [vmem:[%s5] sm:$0x1]
    %v220 = vld [vmem:[%s6] sm:$0x1]
    %vm221 = vcmask 261120
    %v222 = vsel %vm221, %v201, 0.0
    %223 = vadd.xlane.f32.xlu0 %v222
    %v224 = vpop.xlane.xlu0 %223
    %v225 = vsel %vm221, %v206, 0.0
    %226 = vadd.xlane.f32.xlu0 %v225
    %v227 = vpop.xlane.xlu0 %226
    %v228 = vsel %vm221, %v211, 0.0
    %229 = vadd.xlane.f32.xlu0 %v228
    %v230 = vpop.xlane.xlu0 %229
    %v231 = vsel %vm221, %v216, 0.0
    %232 = vadd.xlane.f32.xlu0 %v231
    %v233 = vpop.xlane.xlu0 %232
    %v234 = vrcp.pop 32.0
    %v235 = vmul.f32 %v224, %v234
    %v236 = vmul.f32 %v227, %v234
    %v237 = vmul.f32 %v230, %v234
    %v238 = vmul.f32 %v233, %v234
    %v239 = vsub.f32 %v201, %v235
    %v240 = vsub.f32 %v206, %v236
    %v241 = vsub.f32 %v211, %v237
    %v242 = vsub.f32 %v216, %v238
    %v243 = vmul.f32 %v239, %v239
    %v244 = vmul.f32 %v240, %v240
    %v245 = vmul.f32 %v241, %v241
    %v246 = vmul.f32 %v242, %v242
    %v247 = vsel %vm221, %v243, 0.0
    %248 = vadd.xlane.f32.xlu0 %v247
    %v249 = vpop.xlane.xlu0 %248
    %v250 = vsel %vm221, %v244, 0.0
    %251 = vadd.xlane.f32.xlu0 %v250
    %v252 = vpop.xlane.xlu0 %251
    %v253 = vsel %vm221, %v245, 0.0
    %254 = vadd.xlane.f32.xlu0 %v253
    %v255 = vpop.xlane.xlu0 %254
    %v256 = vsel %vm221, %v246, 0.0
    %257 = vadd.xlane.f32.xlu0 %v256
    %v258 = vpop.xlane.xlu0 %257
    %v259 = vmul.f32 %v249, %v234
    %v260 = vmul.f32 %v252, %v234
    %v261 = vmul.f32 %v255, %v234
    %v262 = vmul.f32 %v258, %v234
    %v263 = vadd.f32 %v259, 1e-05
    %v264 = vadd.f32 %v260, 1e-05
    %v265 = vadd.f32 %v261, 1e-05
    %v266 = vadd.f32 %v262, 1e-05
    %v267 = vrsqrt.pop %v263
    %v268 = vrsqrt.pop %v264
    %v269 = vrsqrt.pop %v265
    %v270 = vrsqrt.pop %v266
    %v271 = vmul.f32 %v239, %v267
    %v272 = vmul.f32 %v240, %v268
    %v273 = vmul.f32 %v241, %v269
    %v274 = vmul.f32 %v242, %v270
    %v276 = vlaneseq
    %v277 = vshrl.u32 %v276, 7
    %v278 = vsub.s32 0, %v277
    %v279 = vrot.slane %v219, %v278
    %v281 = vmul.f32 %v271, %v279
    %v282 = vmul.f32 %v272, %v279
    %v283 = vmul.f32 %v273, %v279
    %v284 = vmul.f32 %v274, %v279
    %v286 = vlaneseq
    %v287 = vshrl.u32 %v286, 7
    %v288 = vsub.s32 0, %v287
    %v289 = vrot.slane %v220, %v288
    %v291 = vadd.f32 %v281, %v289
    %v292 = vadd.f32 %v282, %v289
    %v293 = vadd.f32 %v283, %v289
    %v294 = vadd.f32 %v284, %v289
    %295 = vst.msk [vmem:[#allocation2] sm:$0xff] %vm221, %v291
    %296 = vst.msk [vmem:[#allocation2 + $0x8] sm:$0xff] %vm221, %v292
    %297 = vst.msk [vmem:[#allocation2 + $0x10] sm:$0xff] %vm221, %v293
    %298 = vst.msk [vmem:[#allocation2 + $0x18] sm:$0xff] %vm221, %v294
    // Predicated region
    $region30: #{tpu_custom_call.1} parent=1 // pred_check
      _
    $region31: #{tpu_custom_call.1} parent=1 // pred_check_branch
      %300 = sbr.rel (0) target = $region33
    $region32: #{tpu_custom_call.1} parent=1 // pred_region
      %s302 = ssub.s32 512, 512
      %303 = vsyncadd [#allocation3], %s302
      %s304 = sshll.u32 [#allocation2], 4
      %s305 = int_to_ptr.vmem [resolvable:$true] %s304
      %310 = dma.vmem_to_hbm [thread:$0]  %s305, 512, %s7, [#allocation3], 128, 128, 8
    $region33: #{tpu_custom_call.1} parent=1 // pred_fallthru
      _
    // Predicated region
    $region34: #{tpu_custom_call.1} parent=1 // pred_check
      _
    $region35: #{tpu_custom_call.1} parent=1 // pred_check_branch
      %312 = sbr.rel (0) target = $region37
    $region36: #{tpu_custom_call.1} parent=1 // pred_region
      %313 = dma.done [#allocation3], 512
    $region37: #{tpu_custom_call.1} parent=1 // pred_fallthru
      _
    %314 = vsyncpa [#allocation3], 1

</llo_original>
